<compile_context>
chip_gen: v7x
topology: tpu7x:2x2x1
jax: 0.10.0
libtpu: 0.0.40
codegen_flags: <defaults>
</compile_context>

<pallas_src>
import functools
import math

import numpy as np
import jax
import jax.numpy as jnp
from jax.experimental import pallas as pl
from jax.experimental.pallas import tpu as pltpu


def _round_up(x, m):
    return ((x + m - 1) // m) * m


# ----------------------------------------------------------------------------
# Deterministic table construction (mirrors the PyTorch __init__ formulas).
# ----------------------------------------------------------------------------
def build_window_table(sample_rate, fft_size, f0_floor, f0_ceil):
    table = np.zeros((f0_ceil + 1, fft_size), dtype=np.float32)
    for f0 in range(f0_floor, f0_ceil + 1):
        half_win_len = round(1.5 * sample_rate / f0)
        base_index = np.arange(-half_win_len, half_win_len + 1, dtype=np.float64)
        position = base_index / 1.5 / sample_rate
        left = fft_size // 2 - half_win_len
        right = fft_size // 2 + half_win_len + 1
        window = np.zeros(fft_size, dtype=np.float64)
        window[left:right] = 0.5 * np.cos(math.pi * position * f0) + 0.5
        average = np.sqrt(np.sum(window * window))
        table[f0] = (window / average).astype(np.float32)
    return jnp.asarray(table)


def build_lifter_tables(sample_rate, fft_size, f0_floor, f0_ceil, q1=-0.15):
    bin_size = fft_size // 2 + 1
    q0 = 1.0 - 2.0 * q1
    sl = np.zeros((f0_ceil + 1, bin_size), dtype=np.float32)
    cl = np.zeros((f0_ceil + 1, bin_size), dtype=np.float32)
    quef = np.arange(1, bin_size, dtype=np.float64) / sample_rate
    for f0 in range(f0_floor, f0_ceil + 1):
        s = np.zeros(bin_size, dtype=np.float64)
        c = np.zeros(bin_size, dtype=np.float64)
        s[0] = 1.0
        s[1:] = np.sin(math.pi * f0 * quef) / (math.pi * f0 * quef)
        c[0] = q0 + 2.0 * q1
        c[1:] = q0 + 2.0 * q1 * np.cos(2.0 * math.pi * f0 * quef)
        sl[f0] = s
        cl[f0] = c
    return jnp.asarray(sl), jnp.asarray(cl)


def build_dft_matrices(fft_size, bins_p):
    """rfft / symmetric-rfft / irfft expressed as lane-dense matmul matrices.

    Returns:
      cossin : (fft_size, 2*bins_p)  [Re | Im] of rfft, zero-padded lanes.
      dct    : (bins_p, bins_p)      rfft(even-symmetric ext).real, zero-padded.
      idct   : (bins_p, bins_p)      irfft(real cepstrum)[:bins], zero-padded.
    """
    n = fft_size
    bins = n // 2 + 1
    nn = np.arange(n, dtype=np.float64)[:, None]
    kk = np.arange(bins, dtype=np.float64)[None, :]
    ang = 2.0 * math.pi * nn * kk / n
    cossin = np.zeros((n, 2 * bins_p), dtype=np.float32)
    cossin[:, :bins] = np.cos(ang)                       # Re{rfft}
    cossin[:, bins_p:bins_p + bins] = -np.sin(ang)       # Im{rfft}

    mm = np.arange(bins, dtype=np.float64)[:, None]
    ang2 = 2.0 * math.pi * mm * kk / n
    # rfft of the even-symmetric extension [x, flip(x[1:-1])], real part only:
    cm = np.full((bins, 1), 2.0)
    cm[0, 0] = 1.0
    cm[-1, 0] = 1.0
    dct = np.zeros((bins_p, bins_p), dtype=np.float32)
    dct[:bins, :bins] = cm * np.cos(ang2)
    # irfft of a real cepstrum, keeping the first `bins` output samples:
    wk = np.full((bins, 1), 2.0)
    wk[0, 0] = 1.0
    wk[-1, 0] = 1.0
    idct = np.zeros((bins_p, bins_p), dtype=np.float32)
    idct[:bins, :bins] = wk * np.cos(ang2) / n
    return jnp.asarray(cossin), jnp.asarray(dct), jnp.asarray(idct)


# ----------------------------------------------------------------------------
# Pallas kernel: per tile of tm frames do window*frame, rfft (one fused 256-wide
# matmul for Re|Im), |.|^2, log, cepstrum, liftering, inverse DFT.
# Everything is lane-dense (bins padded to a multiple of 128).
# ----------------------------------------------------------------------------
def _cheaptrick_kernel(frames_ref, win_ref, sl_ref, cl_ref,
                       cossin_ref, dct_ref, idct_ref, out_ref,
                       *, bins_p, clamp_val):
    w = frames_ref[...] * win_ref[...]                                      # (tm, N)
    reim = jnp.dot(w, cossin_ref[...], preferred_element_type=jnp.float32)  # (tm, 2*bins_p)
    re = reim[:, :bins_p]
    im = reim[:, bins_p:]
    sq = re * re + im * im                                                  # |rfft|^2
    # power=True : log(max(|X|^2, 1e-7))
    # power=False: 0.5*log(max(|X|^2, 1e-14)) == log(max(|X|, 1e-7)), the 0.5 is
    #              folded into dct_ref at table-prep time (one EUP op saved).
    logspec = jnp.log(jnp.maximum(sq, clamp_val))
    cep = jnp.dot(logspec, dct_ref[...], preferred_element_type=jnp.float32)
    lift = cep * sl_ref[...] * cl_ref[...]                                  # elim_0th folded into sl
    out_ref[...] = jnp.dot(lift, idct_ref[...], preferred_element_type=jnp.float32)


# ----------------------------------------------------------------------------
# Wrapper (glue: F0 quantization, framing, table gather, padding, reshapes).
# ----------------------------------------------------------------------------
def cheaptrick_forward(x, f, *, sample_rate, hop_size, fft_size,
                       f0_floor, f0_ceil, uv_threshold, tables,
                       power=False, elim_0th=False, tile_rows=128):
    win_tab, sl_tab, cl_tab, cossin_m, dct_m, idct_m = tables
    B, T = x.shape
    Tp = f.shape[1]
    assert T == Tp * hop_size
    bins = fft_size // 2 + 1
    bins_p = dct_m.shape[0]

    # F0 preprocessing (voiced/unvoiced fill, clamp, round to integer index).
    voiced = (f > uv_threshold).astype(x.dtype)
    f_filled = voiced * f + (1.0 - voiced) * f0_ceil
    fi = jnp.round(jnp.clip(f_filled, f0_floor, f0_ceil)).astype(jnp.int32)

    # Framing: pad fft_size//2 on each side, frames of fft_size at hop_size,
    # dropping the last frame (matches torch unfold + x[:, :-1, :]).
    # TODO(synk): move the unfold and the window/lifter row gathers inside the
    # kernel (scalar-prefetched F0 indices + VMEM-resident tables + in-kernel
    # gather) to cut HBM read traffic ~2-4x on bandwidth-limited chips (v5e);
    # requires dynamic sublane gather support, kept host-side for robustness.
    pad = fft_size // 2
    xp = jnp.pad(x, ((0, 0), (pad, pad)))
    idx = jnp.arange(Tp)[:, None] * hop_size + jnp.arange(fft_size)[None, :]
    frames = xp[:, idx]                                    # (B, Tp, fft_size)

    # Flatten rows and pad up to a multiple of the row tile (lane-dense tiles,
    # no masked partial stores; padded rows are sliced away at the end).
    tm = tile_rows                                         # sweep 128..256 per chip
    M = B * Tp
    M_p = _round_up(M, tm)
    frames2 = frames.reshape(M, fft_size).astype(jnp.float32)
    frames2 = jnp.pad(frames2, ((0, M_p - M), (0, 0)))
    fi_flat = jnp.pad(fi.reshape(M), (0, M_p - M), constant_values=f0_floor)

    # Hoisted semantics tweaks (tiny table-side ops, outside the kernel):
    #  * power=False: fold the 0.5 of log(sqrt(x)) into the DCT; clamp moves to
    #    the squared magnitude at 1e-14 (exactly equivalent).
    #  * elim_0th  : zero column 0 of the smoothing lifter.
    clamp_val = 1e-7 if power else 1e-14
    dct_use = dct_m if power else dct_m * 0.5
    sl_pad = jnp.pad(sl_tab, ((0, 0), (0, bins_p - bins)))
    cl_pad = jnp.pad(cl_tab, ((0, 0), (0, bins_p - bins)))
    if elim_0th:
        sl_pad = sl_pad.at[:, 0].set(0.0)

    # F0-dependent row gathers (host/XLA side; see TODO above).
    win2 = win_tab[fi_flat]                                # (M_p, fft_size)
    sl2 = sl_pad[fi_flat]                                  # (M_p, bins_p)
    cl2 = cl_pad[fi_flat]

    grid = (M_p // tm,)
    row_spec_n = pl.BlockSpec((tm, fft_size), lambda i: (i, 0))
    row_spec_b = pl.BlockSpec((tm, bins_p), lambda i: (i, 0))
    full_cs = pl.BlockSpec((fft_size, 2 * bins_p), lambda i: (0, 0))
    full_bb = pl.BlockSpec((bins_p, bins_p), lambda i: (0, 0))

    out = pl.pallas_call(
        functools.partial(_cheaptrick_kernel, bins_p=bins_p, clamp_val=clamp_val),
        out_shape=jax.ShapeDtypeStruct((M_p, bins_p), jnp.float32),
        grid=grid,
        in_specs=[row_spec_n, row_spec_n, row_spec_b, row_spec_b,
                  full_cs, full_bb, full_bb],
        out_specs=row_spec_b,
        compiler_params=pltpu.CompilerParams(
            dimension_semantics=("parallel",),
            vmem_limit_bytes=48 * 1024 * 1024),
    )(frames2, win2, sl2, cl2, cossin_m, dct_use, idct_m)

    return out[:M, :bins].reshape(B, Tp, bins)


# ----------------------------------------------------------------------------
# Pure-JAX reference (uses jnp.fft) for a sanity check.
# ----------------------------------------------------------------------------
def cheaptrick_reference(x, f, *, sample_rate, hop_size, fft_size,
                         f0_floor, f0_ceil, uv_threshold, tables,
                         power=False, elim_0th=False):
    win_tab, sl_tab, cl_tab, *_ = tables
    B, T = x.shape
    Tp = f.shape[1]
    bins = fft_size // 2 + 1

    voiced = (f > uv_threshold).astype(x.dtype)
    f_filled = voiced * f + (1.0 - voiced) * f0_ceil
    fi = jnp.round(jnp.clip(f_filled, f0_floor, f0_ceil)).astype(jnp.int32)

    pad = fft_size // 2
    xp = jnp.pad(x, ((0, 0), (pad, pad)))
    idx = jnp.arange(Tp)[:, None] * hop_size + jnp.arange(fft_size)[None, :]
    frames = xp[:, idx]

    windowed = frames * win_tab[fi]
    spec = jnp.abs(jnp.fft.rfft(windowed, axis=-1))
    spec = spec ** 2 if power else spec
    tmp = jnp.concatenate([spec, spec[..., -2:0:-1]], axis=-1)
    cep = jnp.fft.rfft(jnp.log(jnp.maximum(tmp, 1e-7)), axis=-1).real
    if elim_0th:
        cep = cep.at[..., 0].set(0.0)
    lift = cep * sl_tab[fi] * cl_tab[fi]
    env = jnp.fft.irfft(lift, axis=-1)[..., :bins]
    return env.astype(jnp.float32)


if __name__ == "__main__":
    # Small-but-valid configuration (must satisfy fft_size > 3 * sr / f0_floor).
    sample_rate = 2000
    hop_size = 32
    fft_size = 128
    f0_floor, f0_ceil = 70, 340
    uv_threshold = 0.0
    q1 = -0.15
    assert fft_size > 3.0 * sample_rate / f0_floor

    B, Tp = 2, 8
    T = Tp * hop_size
    bins = fft_size // 2 + 1
    bins_p = _round_up(bins, 128)          # 65 -> 128 lane-dense

    key = jax.random.PRNGKey(0)
    kx, kf = jax.random.split(key)
    x = jax.random.normal(kx, (B, T), dtype=jnp.float32)
    # F0 track with some unvoiced (<=0) and some out-of-range values.
    f = jax.random.uniform(kf, (B, Tp), minval=-50.0, maxval=400.0,
                           dtype=jnp.float32)

    tables = (
        build_window_table(sample_rate, fft_size, f0_floor, f0_ceil),
        *build_lifter_tables(sample_rate, fft_size, f0_floor, f0_ceil, q1),
        *build_dft_matrices(fft_size, bins_p),
    )

    base_cfg = dict(sample_rate=sample_rate, hop_size=hop_size,
                    fft_size=fft_size, f0_floor=f0_floor, f0_ceil=f0_ceil,
                    uv_threshold=uv_threshold, tables=tables)

    # Exercise both code paths (power / elim_0th handled via hoisted tables).
    for power, elim_0th in [(False, False), (True, True)]:
        out = cheaptrick_forward(x, f, power=power, elim_0th=elim_0th,
                                 tile_rows=128, **base_cfg)
        out = jax.block_until_ready(out)
        ref = cheaptrick_reference(x, f, power=power, elim_0th=elim_0th,
                                   **base_cfg)
        assert out.shape == (B, Tp, bins), out.shape
        err = float(jnp.max(jnp.abs(out - ref)))
        assert err < 1e-2, f"mismatch vs jnp.fft reference (power={power}, elim_0th={elim_0th}): {err}"

    print("KERNEL_OK")
</pallas_src>

<mosaic_0001>
module attributes {stable_mosaic.version = 11 : i64} {
  func.func @_cheaptrick_kernel(%arg0: i32, %arg1: memref<128x128xf32, #tpu.memory_space<vmem>>, %arg2: memref<128x128xf32, #tpu.memory_space<vmem>>, %arg3: memref<128x128xf32, #tpu.memory_space<vmem>>, %arg4: memref<128x128xf32, #tpu.memory_space<vmem>>, %arg5: memref<128x256xf32, #tpu.memory_space<vmem>>, %arg6: memref<128x128xf32, #tpu.memory_space<vmem>>, %arg7: memref<128x128xf32, #tpu.memory_space<vmem>>, %arg8: memref<128x128xf32, #tpu.memory_space<vmem>>) attributes {dimension_semantics = [#tpu.dimension_semantics<parallel>], iteration_bounds = array<i64: 1>, scalar_prefetch = 0 : i64, scratch_operands = 0 : i64, tpu.core_type = #tpu.core_type<tc>, window_params = [{transform_indices = @transform_0, window_bounds = array<i64: 128, 128>}, {transform_indices = @transform_1, window_bounds = array<i64: 128, 128>}, {transform_indices = @transform_2, window_bounds = array<i64: 128, 128>}, {transform_indices = @transform_3, window_bounds = array<i64: 128, 128>}, {pipeline_mode = #tpu.pipeline_mode<synchronous>, transform_indices = @transform_4, window_bounds = array<i64: 128, 256>}, {pipeline_mode = #tpu.pipeline_mode<synchronous>, transform_indices = @transform_5, window_bounds = array<i64: 128, 128>}, {pipeline_mode = #tpu.pipeline_mode<synchronous>, transform_indices = @transform_6, window_bounds = array<i64: 128, 128>}, {transform_indices = @transform_7, window_bounds = array<i64: 128, 128>}]} {
    %c0 = arith.constant 0 : index
    %c0_0 = arith.constant 0 : index
    %0 = vector.load %arg1[%c0, %c0_0] : memref<128x128xf32, #tpu.memory_space<vmem>>, vector<128x128xf32>
    %c0_1 = arith.constant 0 : index
    %c0_2 = arith.constant 0 : index
    %1 = vector.load %arg2[%c0_1, %c0_2] : memref<128x128xf32, #tpu.memory_space<vmem>>, vector<128x128xf32>
    %2 = arith.mulf %0, %1 : vector<128x128xf32>
    %c0_3 = arith.constant 0 : index
    %c0_4 = arith.constant 0 : index
    %3 = vector.load %arg5[%c0_3, %c0_4] : memref<128x256xf32, #tpu.memory_space<vmem>>, vector<128x256xf32>
    %cst = arith.constant dense<0.000000e+00> : vector<128x256xf32>
    %4 = tpu.matmul %2, %3, %cst {dimension_numbers = #tpu.dot_dimension_numbers<[1], [0], [0], [1], [0, 0, 1, 1], [], []>} : vector<128x128xf32>, vector<128x256xf32>, vector<128x256xf32> -> vector<128x256xf32>
    %5 = vector.extract_strided_slice %4 {offsets = [0, 0], sizes = [128, 128], strides = [1, 1]} : vector<128x256xf32> to vector<128x128xf32>
    %6 = vector.extract_strided_slice %4 {offsets = [0, 128], sizes = [128, 128], strides = [1, 1]} : vector<128x256xf32> to vector<128x128xf32>
    %7 = arith.mulf %5, %5 : vector<128x128xf32>
    %8 = arith.mulf %6, %6 : vector<128x128xf32>
    %9 = arith.addf %7, %8 : vector<128x128xf32>
    %cst_5 = arith.constant 9.99999982E-15 : f32
    %10 = vector.broadcast %cst_5 : f32 to vector<128x128xf32>
    %11 = arith.maximumf %9, %10 : vector<128x128xf32>
    %12 = math.log %11 : vector<128x128xf32>
    %c0_6 = arith.constant 0 : index
    %c0_7 = arith.constant 0 : index
    %13 = vector.load %arg6[%c0_6, %c0_7] : memref<128x128xf32, #tpu.memory_space<vmem>>, vector<128x128xf32>
    %cst_8 = arith.constant dense<0.000000e+00> : vector<128x128xf32>
    %14 = tpu.matmul %12, %13, %cst_8 {dimension_numbers = #tpu.dot_dimension_numbers<[1], [0], [0], [1], [0, 0, 1, 1], [], []>} : vector<128x128xf32>, vector<128x128xf32>, vector<128x128xf32> -> vector<128x128xf32>
    %c0_9 = arith.constant 0 : index
    %c0_10 = arith.constant 0 : index
    %15 = vector.load %arg3[%c0_9, %c0_10] : memref<128x128xf32, #tpu.memory_space<vmem>>, vector<128x128xf32>
    %16 = arith.mulf %14, %15 : vector<128x128xf32>
    %c0_11 = arith.constant 0 : index
    %c0_12 = arith.constant 0 : index
    %17 = vector.load %arg4[%c0_11, %c0_12] : memref<128x128xf32, #tpu.memory_space<vmem>>, vector<128x128xf32>
    %18 = arith.mulf %16, %17 : vector<128x128xf32>
    %c0_13 = arith.constant 0 : index
    %c0_14 = arith.constant 0 : index
    %19 = vector.load %arg7[%c0_13, %c0_14] : memref<128x128xf32, #tpu.memory_space<vmem>>, vector<128x128xf32>
    %cst_15 = arith.constant dense<0.000000e+00> : vector<128x128xf32>
    %20 = tpu.matmul %18, %19, %cst_15 {dimension_numbers = #tpu.dot_dimension_numbers<[1], [0], [0], [1], [0, 0, 1, 1], [], []>} : vector<128x128xf32>, vector<128x128xf32>, vector<128x128xf32> -> vector<128x128xf32>
    %c0_16 = arith.constant 0 : index
    %c0_17 = arith.constant 0 : index
    %21 = vector.load %arg8[%c0_16, %c0_17] : memref<128x128xf32, #tpu.memory_space<vmem>>, vector<128x128xf32>
    tpu.vector_store %arg8[%c0_16, %c0_17], %20 {strides = array<i32>} : memref<128x128xf32, #tpu.memory_space<vmem>>, vector<128x128xf32>,
    return
  }
  func.func @transform_0(%arg0: i32) -> (i32, i32) {
    %c0_i32 = arith.constant 0 : i32
    %c0_i32_0 = arith.constant 0 : i32
    return %arg0, %c0_i32 : i32, i32
  }
  func.func @transform_1(%arg0: i32) -> (i32, i32) {
    %c0_i32 = arith.constant 0 : i32
    %c0_i32_0 = arith.constant 0 : i32
    return %arg0, %c0_i32 : i32, i32
  }
  func.func @transform_2(%arg0: i32) -> (i32, i32) {
    %c0_i32 = arith.constant 0 : i32
    %c0_i32_0 = arith.constant 0 : i32
    return %arg0, %c0_i32 : i32, i32
  }
  func.func @transform_3(%arg0: i32) -> (i32, i32) {
    %c0_i32 = arith.constant 0 : i32
    %c0_i32_0 = arith.constant 0 : i32
    return %arg0, %c0_i32 : i32, i32
  }
  func.func @transform_4(%arg0: i32) -> (i32, i32) {
    %c0_i32 = arith.constant 0 : i32
    %c0_i32_0 = arith.constant 0 : i32
    %c0_i32_1 = arith.constant 0 : i32
    return %c0_i32, %c0_i32_0 : i32, i32
  }
  func.func @transform_5(%arg0: i32) -> (i32, i32) {
    %c0_i32 = arith.constant 0 : i32
    %c0_i32_0 = arith.constant 0 : i32
    %c0_i32_1 = arith.constant 0 : i32
    return %c0_i32, %c0_i32_0 : i32, i32
  }
  func.func @transform_6(%arg0: i32) -> (i32, i32) {
    %c0_i32 = arith.constant 0 : i32
    %c0_i32_0 = arith.constant 0 : i32
    %c0_i32_1 = arith.constant 0 : i32
    return %c0_i32, %c0_i32_0 : i32, i32
  }
  func.func @transform_7(%arg0: i32) -> (i32, i32) {
    %c0_i32 = arith.constant 0 : i32
    %c0_i32_0 = arith.constant 0 : i32
    return %arg0, %c0_i32 : i32, i32
  }
}

</mosaic_0001>

<llo_original>
// kernel: tpu_custom_call.1
$region0: #{tpu_custom_call.1}
  #allocation0 [shape = 'u32[]', space=smem, size = 0x4, offset = 0x4, fixed_abs, tag = 'smem constant byte address 0x4 - core index']
  #allocation1 [shape = 'u32[144,128]{1,0:T(1,128)}', space=vmem, size = 0x12000, scoped, tag = 'internal scratch']
  %s0 = inlined_call_operand.hbm [shape: f32[128,128], index: 0, kind: input, shape index: {}]
  %s1 = inlined_call_operand.hbm [shape: f32[128,128], index: 1, kind: input, shape index: {}]
  %s2 = inlined_call_operand.hbm [shape: f32[128,128], index: 2, kind: input, shape index: {}]
  %s3 = inlined_call_operand.hbm [shape: f32[128,128], index: 3, kind: input, shape index: {}]
  %s4 = inlined_call_operand.hbm [shape: f32[128,256], index: 4, kind: input, shape index: {}]
  %s5 = inlined_call_operand.hbm [shape: f32[128,128], index: 5, kind: input, shape index: {}]
  %s6 = inlined_call_operand.hbm [shape: f32[128,128], index: 6, kind: input, shape index: {}]
  %s7 = inlined_call_operand.hbm [shape: f32[128,128], index: 7, kind: output, shape index: {}]
  %s8 = sld [smem:[#allocation0]]
  $region66: #{tpu_custom_call.1} parent=0
    _
  %s10 = ssub.s32 1, %s8
  %s11 = scalar_select 0, %s10, %s8
  $region1: #{tpu_custom_call.1} parent=0
    #allocation2 [shape = 'u8[65536]{0}', space=vmem, size = 0x10000, scoped, tag = 'input window, operand 0, single buffered']
    #allocation3 [shape = 's32[1]{0}', space=sflag, size = 0x4, scoped, tag = 'scoped memory for tpu_custom_call.1']
    #allocation4 [shape = 's32[1]{0}', space=sflag, size = 0x4, scoped, tag = 'scoped memory for tpu_custom_call.1']
    #allocation5 [shape = 'u8[65536]{0}', space=vmem, size = 0x10000, scoped, tag = 'input window, operand 1, single buffered']
    #allocation6 [shape = 's32[1]{0}', space=sflag, size = 0x4, scoped, tag = 'scoped memory for tpu_custom_call.1']
    #allocation7 [shape = 'u8[65536]{0}', space=vmem, size = 0x10000, scoped, tag = 'input window, operand 2, single buffered']
    #allocation8 [shape = 'u8[65536]{0}', space=vmem, size = 0x10000, scoped, tag = 'input window, operand 3, single buffered']
    #allocation9 [shape = 's32[1]{0}', space=sflag, size = 0x4, scoped, tag = 'scoped memory for tpu_custom_call.1']
    #allocation10 [shape = 'u8[131072]{0}', space=vmem, size = 0x20000, scoped, tag = 'input window, operand 4, single buffered']
    #allocation11 [shape = 'u8[65536]{0}', space=vmem, size = 0x10000, scoped, tag = 'input window, operand 5, single buffered']
    #allocation12 [shape = 's32[1]{0}', space=sflag, size = 0x4, scoped, tag = 'scoped memory for tpu_custom_call.1']
    #allocation13 [shape = 'u8[65536]{0}', space=vmem, size = 0x10000, scoped, tag = 'input window, operand 6, single buffered']
    #allocation14 [shape = 'u8[65536]{0}', space=vmem, size = 0x10000, scoped, tag = 'output window, operand 0, single buffered']
    %12 = vsyncpa [#allocation3], 0
    %13 = vsyncpa [#allocation6], 0
    %14 = vsyncpa [#allocation9], 0
    %15 = vsyncpa [#allocation12], 0
    %16 = vsyncpa [#allocation4], 0
    // Predicated region
    $region2: #{tpu_custom_call.1} parent=1 // pred_check
      _
    $region3: #{tpu_custom_call.1} parent=1 // pred_check_branch
      %18 = sbr.rel (0) target = $region5
    $region4: #{tpu_custom_call.1} parent=1 // pred_region
      %s20 = ssub.s32 2048, 2048
      %21 = vsyncadd [#allocation3], %s20
      %s22 = sshll.u32 [#allocation2], 4
      %s23 = int_to_ptr.vmem [resolvable:$true] %s22
      %28 = dma.hbm_to_vmem [thread:$0]  %s0, 2048, %s23, [#allocation3], 128, 128, 8
    $region5: #{tpu_custom_call.1} parent=1 // pred_fallthru
      _
    // Predicated region
    $region6: #{tpu_custom_call.1} parent=1 // pred_check
      _
    $region7: #{tpu_custom_call.1} parent=1 // pred_check_branch
      %30 = sbr.rel (0) target = $region9
    $region8: #{tpu_custom_call.1} parent=1 // pred_region
      %s32 = ssub.s32 2048, 2048
      %33 = vsyncadd [#allocation6], %s32
      %s34 = sshll.u32 [#allocation5], 4
      %s35 = int_to_ptr.vmem [resolvable:$true] %s34
      %40 = dma.hbm_to_vmem [thread:$0]  %s1, 2048, %s35, [#allocation6], 128, 128, 8
    $region9: #{tpu_custom_call.1} parent=1 // pred_fallthru
      _
    // Predicated region
    $region10: #{tpu_custom_call.1} parent=1 // pred_check
      _
    $region11: #{tpu_custom_call.1} parent=1 // pred_check_branch
      %42 = sbr.rel (0) target = $region13
    $region12: #{tpu_custom_call.1} parent=1 // pred_region
      %s44 = ssub.s32 2048, 2048
      %45 = vsyncadd [#allocation6], %s44
      %s46 = sshll.u32 [#allocation7], 4
      %s47 = int_to_ptr.vmem [resolvable:$true] %s46
      %52 = dma.hbm_to_vmem [thread:$0]  %s2, 2048, %s47, [#allocation6], 128, 128, 8
    $region13: #{tpu_custom_call.1} parent=1 // pred_fallthru
      _
    // Predicated region
    $region14: #{tpu_custom_call.1} parent=1 // pred_check
      _
    $region15: #{tpu_custom_call.1} parent=1 // pred_check_branch
      %54 = sbr.rel (0) target = $region17
    $region16: #{tpu_custom_call.1} parent=1 // pred_region
      %s56 = ssub.s32 2048, 2048
      %57 = vsyncadd [#allocation9], %s56
      %s58 = sshll.u32 [#allocation8], 4
      %s59 = int_to_ptr.vmem [resolvable:$true] %s58
      %64 = dma.hbm_to_vmem [thread:$0]  %s3, 2048, %s59, [#allocation9], 128, 128, 8
    $region17: #{tpu_custom_call.1} parent=1 // pred_fallthru
      _
    // Predicated region
    $region18: #{tpu_custom_call.1} parent=1 // pred_check
      _
    $region19: #{tpu_custom_call.1} parent=1 // pred_check_branch
      %66 = sbr.rel (0) target = $region21
    $region20: #{tpu_custom_call.1} parent=1 // pred_region
      %s68 = ssub.s32 4096, 4096
      %69 = vsyncadd [#allocation9], %s68
      %s70 = sshll.u32 [#allocation10], 4
      %s71 = int_to_ptr.vmem [resolvable:$true] %s70
      %76 = dma.hbm_to_vmem [thread:$0]  %s4, 4096, %s71, [#allocation9], 256, 256, 16
    $region21: #{tpu_custom_call.1} parent=1 // pred_fallthru
      _
    // Predicated region
    $region22: #{tpu_custom_call.1} parent=1 // pred_check
      _
    $region23: #{tpu_custom_call.1} parent=1 // pred_check_branch
      %78 = sbr.rel (0) target = $region25
    $region24: #{tpu_custom_call.1} parent=1 // pred_region
      %s80 = ssub.s32 2048, 2048
      %81 = vsyncadd [#allocation12], %s80
      %s82 = sshll.u32 [#allocation11], 4
      %s83 = int_to_ptr.vmem [resolvable:$true] %s82
      %88 = dma.hbm_to_vmem [thread:$0]  %s5, 2048, %s83, [#allocation12], 128, 128, 8
    $region25: #{tpu_custom_call.1} parent=1 // pred_fallthru
      _
    // Predicated region
    $region26: #{tpu_custom_call.1} parent=1 // pred_check
      _
    $region27: #{tpu_custom_call.1} parent=1 // pred_check_branch
      %90 = sbr.rel (0) target = $region29
    $region28: #{tpu_custom_call.1} parent=1 // pred_region
      %s92 = ssub.s32 2048, 2048
      %93 = vsyncadd [#allocation12], %s92
      %s94 = sshll.u32 [#allocation13], 4
      %s95 = int_to_ptr.vmem [resolvable:$true] %s94
      %100 = dma.hbm_to_vmem [thread:$0]  %s6, 2048, %s95, [#allocation12], 128, 128, 8
    $region29: #{tpu_custom_call.1} parent=1 // pred_fallthru
      _
    // Predicated region
    $region30: #{tpu_custom_call.1} parent=1 // pred_check
      _
    $region31: #{tpu_custom_call.1} parent=1 // pred_check_branch
      %102 = sbr.rel (0) target = $region33
    $region32: #{tpu_custom_call.1} parent=1 // pred_region
      %103 = dma.done [#allocation3], 2048
    $region33: #{tpu_custom_call.1} parent=1 // pred_fallthru
      _
    // Predicated region
    $region34: #{tpu_custom_call.1} parent=1 // pred_check
      _
    $region35: #{tpu_custom_call.1} parent=1 // pred_check_branch
      %105 = sbr.rel (0) target = $region37
    $region36: #{tpu_custom_call.1} parent=1 // pred_region
      %106 = dma.done [#allocation6], 2048
    $region37: #{tpu_custom_call.1} parent=1 // pred_fallthru
      _
    // Predicated region
    $region38: #{tpu_custom_call.1} parent=1 // pred_check
      _
    $region39: #{tpu_custom_call.1} parent=1 // pred_check_branch
      %108 = sbr.rel (0) target = $region41
    $region40: #{tpu_custom_call.1} parent=1 // pred_region
      %109 = dma.done [#allocation6], 2048
    $region41: #{tpu_custom_call.1} parent=1 // pred_fallthru
      _
    // Predicated region
    $region42: #{tpu_custom_call.1} parent=1 // pred_check
      _
    $region43: #{tpu_custom_call.1} parent=1 // pred_check_branch
      %111 = sbr.rel (0) target = $region45
    $region44: #{tpu_custom_call.1} parent=1 // pred_region
      %112 = dma.done [#allocation9], 2048
    $region45: #{tpu_custom_call.1} parent=1 // pred_fallthru
      _
    // Predicated region
    $region46: #{tpu_custom_call.1} parent=1 // pred_check
      _
    $region47: #{tpu_custom_call.1} parent=1 // pred_check_branch
      %114 = sbr.rel (0) target = $region49
    $region48: #{tpu_custom_call.1} parent=1 // pred_region
      %115 = dma.done [#allocation9], 4096
    $region49: #{tpu_custom_call.1} parent=1 // pred_fallthru
      _
    // Predicated region
    $region50: #{tpu_custom_call.1} parent=1 // pred_check
      _
    $region51: #{tpu_custom_call.1} parent=1 // pred_check_branch
      %117 = sbr.rel (0) target = $region53
    $region52: #{tpu_custom_call.1} parent=1 // pred_region
      %118 = dma.done [#allocation12], 2048
    $region53: #{tpu_custom_call.1} parent=1 // pred_fallthru
      _
    // Predicated region
    $region54: #{tpu_custom_call.1} parent=1 // pred_check
      _
    $region55: #{tpu_custom_call.1} parent=1 // pred_check_branch
      %120 = sbr.rel (0) target = $region57
    $region56: #{tpu_custom_call.1} parent=1 // pred_region
      %121 = dma.done [#allocation12], 2048
    $region57: #{tpu_custom_call.1} parent=1 // pred_fallthru
      _
    %v122 = vld [vmem:[#allocation2] sm:$0xff]
    %v123 = vld [vmem:[#allocation2 + $0x8] sm:$0xff]
    %v124 = vld [vmem:[#allocation2 + $0x10] sm:$0xff]
    %v125 = vld [vmem:[#allocation2 + $0x18] sm:$0xff]
    %v126 = vld [vmem:[#allocation2 + $0x20] sm:$0xff]
    %v127 = vld [vmem:[#allocation2 + $0x28] sm:$0xff]
    %v128 = vld [vmem:[#allocation2 + $0x30] sm:$0xff]
    %v129 = vld [vmem:[#allocation2 + $0x38] sm:$0xff]
    %v130 = vld [vmem:[#allocation2 + $0x40] sm:$0xff]
    %v131 = vld [vmem:[#allocation2 + $0x48] sm:$0xff]
    %v132 = vld [vmem:[#allocation2 + $0x50] sm:$0xff]
    %v133 = vld [vmem:[#allocation2 + $0x58] sm:$0xff]
    %v134 = vld [vmem:[#allocation2 + $0x60] sm:$0xff]
    %v135 = vld [vmem:[#allocation2 + $0x68] sm:$0xff]
    %v136 = vld [vmem:[#allocation2 + $0x70] sm:$0xff]
    %v137 = vld [vmem:[#allocation2 + $0x78] sm:$0xff]
    %v138 = vld [vmem:[#allocation5] sm:$0xff]
    %v139 = vld [vmem:[#allocation5 + $0x8] sm:$0xff]
    %v140 = vld [vmem:[#allocation5 + $0x10] sm:$0xff]
    %v141 = vld [vmem:[#allocation5 + $0x18] sm:$0xff]
    %v142 = vld [vmem:[#allocation5 + $0x20] sm:$0xff]
    %v143 = vld [vmem:[#allocation5 + $0x28] sm:$0xff]
    %v144 = vld [vmem:[#allocation5 + $0x30] sm:$0xff]
    %v145 = vld [vmem:[#allocation5 + $0x38] sm:$0xff]
    %v146 = vld [vmem:[#allocation5 + $0x40] sm:$0xff]
    %v147 = vld [vmem:[#allocation5 + $0x48] sm:$0xff]
    %v148 = vld [vmem:[#allocation5 + $0x50] sm:$0xff]
    %v149 = vld [vmem:[#allocation5 + $0x58] sm:$0xff]
    %v150 = vld [vmem:[#allocation5 + $0x60] sm:$0xff]
    %v151 = vld [vmem:[#allocation5 + $0x68] sm:$0xff]
    %v152 = vld [vmem:[#allocation5 + $0x70] sm:$0xff]
    %v153 = vld [vmem:[#allocation5 + $0x78] sm:$0xff]
    %v154 = vmul.f32 %v122, %v138
    %v155 = vmul.f32 %v123, %v139
    %v156 = vmul.f32 %v124, %v140
    %v157 = vmul.f32 %v125, %v141
    %v158 = vmul.f32 %v126, %v142
    %v159 = vmul.f32 %v127, %v143
    %v160 = vmul.f32 %v128, %v144
    %v161 = vmul.f32 %v129, %v145
    %v162 = vmul.f32 %v130, %v146
    %v163 = vmul.f32 %v131, %v147
    %v164 = vmul.f32 %v132, %v148
    %v165 = vmul.f32 %v133, %v149
    %v166 = vmul.f32 %v134, %v150
    %v167 = vmul.f32 %v135, %v151
    %v168 = vmul.f32 %v136, %v152
    %v169 = vmul.f32 %v137, %v153
    %v170 = vld [vmem:[#allocation10] sm:$0xff]
    %v171 = vld [vmem:[#allocation10 + $0x8] sm:$0xff]
    %v172 = vld [vmem:[#allocation10 + $0x10] sm:$0xff]
    %v173 = vld [vmem:[#allocation10 + $0x18] sm:$0xff]
    %v174 = vld [vmem:[#allocation10 + $0x20] sm:$0xff]
    %v175 = vld [vmem:[#allocation10 + $0x28] sm:$0xff]
    %v176 = vld [vmem:[#allocation10 + $0x30] sm:$0xff]
    %v177 = vld [vmem:[#allocation10 + $0x38] sm:$0xff]
    %v178 = vld [vmem:[#allocation10 + $0x40] sm:$0xff]
    %v179 = vld [vmem:[#allocation10 + $0x48] sm:$0xff]
    %v180 = vld [vmem:[#allocation10 + $0x50] sm:$0xff]
    %v181 = vld [vmem:[#allocation10 + $0x58] sm:$0xff]
    %v182 = vld [vmem:[#allocation10 + $0x60] sm:$0xff]
    %v183 = vld [vmem:[#allocation10 + $0x68] sm:$0xff]
    %v184 = vld [vmem:[#allocation10 + $0x70] sm:$0xff]
    %v185 = vld [vmem:[#allocation10 + $0x78] sm:$0xff]
    %v186 = vld [vmem:[#allocation10 + $0x80] sm:$0xff]
    %v187 = vld [vmem:[#allocation10 + $0x88] sm:$0xff]
    %v188 = vld [vmem:[#allocation10 + $0x90] sm:$0xff]
    %v189 = vld [vmem:[#allocation10 + $0x98] sm:$0xff]
    %v190 = vld [vmem:[#allocation10 + $0xa0] sm:$0xff]
    %v191 = vld [vmem:[#allocation10 + $0xa8] sm:$0xff]
    %v192 = vld [vmem:[#allocation10 + $0xb0] sm:$0xff]
    %v193 = vld [vmem:[#allocation10 + $0xb8] sm:$0xff]
    %v194 = vld [vmem:[#allocation10 + $0xc0] sm:$0xff]
    %v195 = vld [vmem:[#allocation10 + $0xc8] sm:$0xff]
    %v196 = vld [vmem:[#allocation10 + $0xd0] sm:$0xff]
    %v197 = vld [vmem:[#allocation10 + $0xd8] sm:$0xff]
    %v198 = vld [vmem:[#allocation10 + $0xe0] sm:$0xff]
    %v199 = vld [vmem:[#allocation10 + $0xe8] sm:$0xff]
    %v200 = vld [vmem:[#allocation10 + $0xf0] sm:$0xff]
    %v201 = vld [vmem:[#allocation10 + $0xf8] sm:$0xff]
    %202 = vmatprep.subr.mxu0 %v171
    %203 = vmatpush1.msra.mxu0 %v170
    %204 = vmatprep.subr.mxu0 %v173
    %205 = vmatpush1.msra.mxu0 %v172
    %206 = vmatprep.subr.mxu0 %v175
    %207 = vmatpush1.msra.mxu0 %v174
    %208 = vmatprep.subr.mxu0 %v177
    %209 = vmatpush1.msra.mxu0 %v176
    %210 = vmatprep.subr.mxu0 %v179
    %211 = vmatpush1.msra.mxu0 %v178
    %212 = vmatprep.subr.mxu0 %v181
    %213 = vmatpush1.msra.mxu0 %v180
    %214 = vmatprep.subr.mxu0 %v183
    %215 = vmatpush1.msra.mxu0 %v182
    %216 = vmatprep.subr.mxu0 %v185
    %217 = vmatpush1.msra.mxu0 %v184
    %218 = vmatprep.subr.mxu0 %v187
    %219 = vmatpush1.msra.mxu0 %v186
    %220 = vmatprep.subr.mxu0 %v189
    %221 = vmatpush1.msra.mxu0 %v188
    %222 = vmatprep.subr.mxu0 %v191
    %223 = vmatpush1.msra.mxu0 %v190
    %224 = vmatprep.subr.mxu0 %v193
    %225 = vmatpush1.msra.mxu0 %v192
    %226 = vmatprep.subr.mxu0 %v195
    %227 = vmatpush1.msra.mxu0 %v194
    %228 = vmatprep.subr.mxu0 %v197
    %229 = vmatpush1.msra.mxu0 %v196
    %230 = vmatprep.subr.mxu0 %v199
    %231 = vmatpush1.msra.mxu0 %v198
    %232 = vmatprep.subr.mxu0 %v201
    %233 = vmatpush1.msra.mxu0 %v200
    %234 = vmatprep.subr.mxu0 0.0
    %235 = vmatpush1.msra.mxu0 0.0
    %236 = vmatprep.subr.mxu0 0.0
    %237 = vmatpush1.msra.mxu0 0.0
    %238 = vmatprep.subr.mxu0 0.0
    %239 = vmatpush1.msra.mxu0 0.0
    %240 = vmatprep.subr.mxu0 0.0
    %241 = vmatpush1.msra.mxu0 0.0
    %242 = vmatprep.subr.mxu0 0.0
    %243 = vmatpush1.msra.mxu0 0.0
    %244 = vmatprep.subr.mxu0 0.0
    %245 = vmatpush1.msra.mxu0 0.0
    %246 = vmatprep.subr.mxu0 0.0
    %247 = vmatpush1.msra.mxu0 0.0
    %248 = vmatprep.subr.mxu0 0.0
    %249 = vmatpush1.msra.mxu0 0.0
    %250 = vmatprep.subr.mxu0 0.0
    %251 = vmatpush1.msra.mxu0 0.0
    %252 = vmatprep.subr.mxu0 0.0
    %253 = vmatpush1.msra.mxu0 0.0
    %254 = vmatprep.subr.mxu0 0.0
    %255 = vmatpush1.msra.mxu0 0.0
    %256 = vmatprep.subr.mxu0 0.0
    %257 = vmatpush1.msra.mxu0 0.0
    %258 = vmatprep.subr.mxu0 0.0
    %259 = vmatpush1.msra.mxu0 0.0
    %260 = vmatprep.subr.mxu0 0.0
    %261 = vmatpush1.msra.mxu0 0.0
    %262 = vmatprep.subr.mxu0 0.0
    %263 = vmatpush1.msra.mxu0 0.0
    %264 = vmatprep.subr.mxu0 0.0
    %265 = vmatpush1.msra.mxu0 0.0
    %266 = vmatprep.mubr.f32.mxu0 0.0
    %267 = vmatmul.mubr.f32.gmra.mrb[0].mxu0 %v154
    %v268 = vpop.f32.mrb[0].mxu0
    %v269 = vadd.f32 0.0, %v268
    %v270 = vpop.f32.mrb[0].mxu0
    %v271 = vadd.f32 0.0, %v270
    %272 = vmatprep.mubr.f32.mxu0 0.0
    %273 = vmatmul.mubr.f32.gmra.mrb[0].mxu0 %v155
    %v274 = vpop.f32.mrb[0].mxu0
    %v275 = vadd.f32 0.0, %v274
    %v276 = vpop.f32.mrb[0].mxu0
    %v277 = vadd.f32 0.0, %v276
    %278 = vmatprep.mubr.f32.mxu0 0.0
    %279 = vmatmul.mubr.f32.gmra.mrb[0].mxu0 %v156
    %v280 = vpop.f32.mrb[0].mxu0
    %v281 = vadd.f32 0.0, %v280
    %v282 = vpop.f32.mrb[0].mxu0
    %v283 = vadd.f32 0.0, %v282
    %284 = vmatprep.mubr.f32.mxu0 0.0
    %285 = vmatmul.mubr.f32.gmra.mrb[0].mxu0 %v157
    %v286 = vpop.f32.mrb[0].mxu0
    %v287 = vadd.f32 0.0, %v286
    %v288 = vpop.f32.mrb[0].mxu0
    %v289 = vadd.f32 0.0, %v288
    %290 = vmatprep.mubr.f32.mxu0 0.0
    %291 = vmatmul.mubr.f32.gmra.mrb[0].mxu0 %v158
    %v292 = vpop.f32.mrb[0].mxu0
    %v293 = vadd.f32 0.0, %v292
    %v294 = vpop.f32.mrb[0].mxu0
    %v295 = vadd.f32 0.0, %v294
    %296 = vmatprep.mubr.f32.mxu0 0.0
    %297 = vmatmul.mubr.f32.gmra.mrb[0].mxu0 %v159
    %v298 = vpop.f32.mrb[0].mxu0
    %v299 = vadd.f32 0.0, %v298
    %v300 = vpop.f32.mrb[0].mxu0
    %v301 = vadd.f32 0.0, %v300
    %302 = vmatprep.mubr.f32.mxu0 0.0
    %303 = vmatmul.mubr.f32.gmra.mrb[0].mxu0 %v160
    %v304 = vpop.f32.mrb[0].mxu0
    %v305 = vadd.f32 0.0, %v304
    %v306 = vpop.f32.mrb[0].mxu0
    %v307 = vadd.f32 0.0, %v306
    %308 = vmatprep.mubr.f32.mxu0 0.0
    %309 = vmatmul.mubr.f32.gmra.mrb[0].mxu0 %v161
    %v310 = vpop.f32.mrb[0].mxu0
    %v311 = vadd.f32 0.0, %v310
    %v312 = vpop.f32.mrb[0].mxu0
    %v313 = vadd.f32 0.0, %v312
    %314 = vmatprep.mubr.f32.mxu0 0.0
    %315 = vmatmul.mubr.f32.gmra.mrb[0].mxu0 %v162
    %v316 = vpop.f32.mrb[0].mxu0
    %v317 = vadd.f32 0.0, %v316
    %v318 = vpop.f32.mrb[0].mxu0
    %v319 = vadd.f32 0.0, %v318
    %320 = vmatprep.mubr.f32.mxu0 0.0
    %321 = vmatmul.mubr.f32.gmra.mrb[0].mxu0 %v163
    %v322 = vpop.f32.mrb[0].mxu0
    %v323 = vadd.f32 0.0, %v322
    %v324 = vpop.f32.mrb[0].mxu0
    %v325 = vadd.f32 0.0, %v324
    %326 = vmatprep.mubr.f32.mxu0 0.0
    %327 = vmatmul.mubr.f32.gmra.mrb[0].mxu0 %v164
    %v328 = vpop.f32.mrb[0].mxu0
    %v329 = vadd.f32 0.0, %v328
    %v330 = vpop.f32.mrb[0].mxu0
    %v331 = vadd.f32 0.0, %v330
    %332 = vmatprep.mubr.f32.mxu0 0.0
    %333 = vmatmul.mubr.f32.gmra.mrb[0].mxu0 %v165
    %v334 = vpop.f32.mrb[0].mxu0
    %v335 = vadd.f32 0.0, %v334
    %v336 = vpop.f32.mrb[0].mxu0
    %v337 = vadd.f32 0.0, %v336
    %338 = vmatprep.mubr.f32.mxu0 0.0
    %339 = vmatmul.mubr.f32.gmra.mrb[0].mxu0 %v166
    %v340 = vpop.f32.mrb[0].mxu0
    %v341 = vadd.f32 0.0, %v340
    %v342 = vpop.f32.mrb[0].mxu0
    %v343 = vadd.f32 0.0, %v342
    %344 = vmatprep.mubr.f32.mxu0 0.0
    %345 = vmatmul.mubr.f32.gmra.mrb[0].mxu0 %v167
    %v346 = vpop.f32.mrb[0].mxu0
    %v347 = vadd.f32 0.0, %v346
    %v348 = vpop.f32.mrb[0].mxu0
    %v349 = vadd.f32 0.0, %v348
    %350 = vmatprep.mubr.f32.mxu0 0.0
    %351 = vmatmul.mubr.f32.gmra.mrb[0].mxu0 %v168
    %v352 = vpop.f32.mrb[0].mxu0
    %v353 = vadd.f32 0.0, %v352
    %v354 = vpop.f32.mrb[0].mxu0
    %v355 = vadd.f32 0.0, %v354
    %356 = vmatprep.mubr.f32.mxu0 0.0
    %357 = vmatmul.mubr.f32.gmra.mrb[0].mxu0 %v169
    %v358 = vpop.f32.mrb[0].mxu0
    %v359 = vadd.f32 0.0, %v358
    %v360 = vpop.f32.mrb[0].mxu0
    %v361 = vadd.f32 0.0, %v360
    %362 = vdwg.mxu0
    %v363 = vmul.f32 %v269, %v269
    %v364 = vmul.f32 %v275, %v275
    %v365 = vmul.f32 %v281, %v281
    %v366 = vmul.f32 %v287, %v287
    %v367 = vmul.f32 %v293, %v293
    %v368 = vmul.f32 %v299, %v299
    %v369 = vmul.f32 %v305, %v305
    %v370 = vmul.f32 %v311, %v311
    %v371 = vmul.f32 %v317, %v317
    %v372 = vmul.f32 %v323, %v323
    %v373 = vmul.f32 %v329, %v329
    %v374 = vmul.f32 %v335, %v335
    %v375 = vmul.f32 %v341, %v341
    %v376 = vmul.f32 %v347, %v347
    %v377 = vmul.f32 %v353, %v353
    %v378 = vmul.f32 %v359, %v359
    %v379 = vmul.f32 %v271, %v271
    %v380 = vmul.f32 %v277, %v277
    %v381 = vmul.f32 %v283, %v283
    %v382 = vmul.f32 %v289, %v289
    %v383 = vmul.f32 %v295, %v295
    %v384 = vmul.f32 %v301, %v301
    %v385 = vmul.f32 %v307, %v307
    %v386 = vmul.f32 %v313, %v313
    %v387 = vmul.f32 %v319, %v319
    %v388 = vmul.f32 %v325, %v325
    %v389 = vmul.f32 %v331, %v331
    %v390 = vmul.f32 %v337, %v337
    %v391 = vmul.f32 %v343, %v343
    %v392 = vmul.f32 %v349, %v349
    %v393 = vmul.f32 %v355, %v355
    %v394 = vmul.f32 %v361, %v361
    %v395 = vadd.f32 %v363, %v379
    %v396 = vadd.f32 %v364, %v380
    %v397 = vadd.f32 %v365, %v381
    %v398 = vadd.f32 %v366, %v382
    %v399 = vadd.f32 %v367, %v383
    %v400 = vadd.f32 %v368, %v384
    %v401 = vadd.f32 %v369, %v385
    %v402 = vadd.f32 %v370, %v386
    %v403 = vadd.f32 %v371, %v387
    %v404 = vadd.f32 %v372, %v388
    %v405 = vadd.f32 %v373, %v389
    %v406 = vadd.f32 %v374, %v390
    %v407 = vadd.f32 %v375, %v391
    %v408 = vadd.f32 %v376, %v392
    %v409 = vadd.f32 %v377, %v393
    %v410 = vadd.f32 %v378, %v394
    %v411 = vmax.f32 %v395, 1e-14
    %v412 = vmax.f32 %v396, 1e-14
    %v413 = vmax.f32 %v397, 1e-14
    %v414 = vmax.f32 %v398, 1e-14
    %v415 = vmax.f32 %v399, 1e-14
    %v416 = vmax.f32 %v400, 1e-14
    %v417 = vmax.f32 %v401, 1e-14
    %v418 = vmax.f32 %v402, 1e-14
    %v419 = vmax.f32 %v403, 1e-14
    %v420 = vmax.f32 %v404, 1e-14
    %v421 = vmax.f32 %v405, 1e-14
    %v422 = vmax.f32 %v406, 1e-14
    %v423 = vmax.f32 %v407, 1e-14
    %v424 = vmax.f32 %v408, 1e-14
    %v425 = vmax.f32 %v409, 1e-14
    %v426 = vmax.f32 %v410, 1e-14
    %v427 = vlog2.pop %v411
    %v428 = vmul.f32 %v427, 0.6931472
    %v429 = vlog2.pop %v412
    %v430 = vmul.f32 %v429, 0.6931472
    %v431 = vlog2.pop %v413
    %v432 = vmul.f32 %v431, 0.6931472
    %v433 = vlog2.pop %v414
    %v434 = vmul.f32 %v433, 0.6931472
    %v435 = vlog2.pop %v415
    %v436 = vmul.f32 %v435, 0.6931472
    %v437 = vlog2.pop %v416
    %v438 = vmul.f32 %v437, 0.6931472
    %v439 = vlog2.pop %v417
    %v440 = vmul.f32 %v439, 0.6931472
    %v441 = vlog2.pop %v418
    %v442 = vmul.f32 %v441, 0.6931472
    %v443 = vlog2.pop %v419
    %v444 = vmul.f32 %v443, 0.6931472
    %v445 = vlog2.pop %v420
    %v446 = vmul.f32 %v445, 0.6931472
    %v447 = vlog2.pop %v421
    %v448 = vmul.f32 %v447, 0.6931472
    %v449 = vlog2.pop %v422
    %v450 = vmul.f32 %v449, 0.6931472
    %v451 = vlog2.pop %v423
    %v452 = vmul.f32 %v451, 0.6931472
    %v453 = vlog2.pop %v424
    %v454 = vmul.f32 %v453, 0.6931472
    %v455 = vlog2.pop %v425
    %v456 = vmul.f32 %v455, 0.6931472
    %v457 = vlog2.pop %v426
    %v458 = vmul.f32 %v457, 0.6931472
    %v459 = vld [vmem:[#allocation11] sm:$0xff]
    %v460 = vld [vmem:[#allocation11 + $0x8] sm:$0xff]
    %v461 = vld [vmem:[#allocation11 + $0x10] sm:$0xff]
    %v462 = vld [vmem:[#allocation11 + $0x18] sm:$0xff]
    %v463 = vld [vmem:[#allocation11 + $0x20] sm:$0xff]
    %v464 = vld [vmem:[#allocation11 + $0x28] sm:$0xff]
    %v465 = vld [vmem:[#allocation11 + $0x30] sm:$0xff]
    %v466 = vld [vmem:[#allocation11 + $0x38] sm:$0xff]
    %v467 = vld [vmem:[#allocation11 + $0x40] sm:$0xff]
    %v468 = vld [vmem:[#allocation11 + $0x48] sm:$0xff]
    %v469 = vld [vmem:[#allocation11 + $0x50] sm:$0xff]
    %v470 = vld [vmem:[#allocation11 + $0x58] sm:$0xff]
    %v471 = vld [vmem:[#allocation11 + $0x60] sm:$0xff]
    %v472 = vld [vmem:[#allocation11 + $0x68] sm:$0xff]
    %v473 = vld [vmem:[#allocation11 + $0x70] sm:$0xff]
    %v474 = vld [vmem:[#allocation11 + $0x78] sm:$0xff]
    %475 = vmatprep.subr.mxu0 0.0
    %476 = vmatpush1.msra.mxu0 %v459
    %477 = vmatprep.subr.mxu0 0.0
    %478 = vmatpush1.msra.mxu0 %v460
    %479 = vmatprep.subr.mxu0 0.0
    %480 = vmatpush1.msra.mxu0 %v461
    %481 = vmatprep.subr.mxu0 0.0
    %482 = vmatpush1.msra.mxu0 %v462
    %483 = vmatprep.subr.mxu0 0.0
    %484 = vmatpush1.msra.mxu0 %v463
    %485 = vmatprep.subr.mxu0 0.0
    %486 = vmatpush1.msra.mxu0 %v464
    %487 = vmatprep.subr.mxu0 0.0
    %488 = vmatpush1.msra.mxu0 %v465
    %489 = vmatprep.subr.mxu0 0.0
    %490 = vmatpush1.msra.mxu0 %v466
    %491 = vmatprep.subr.mxu0 0.0
    %492 = vmatpush1.msra.mxu0 %v467
    %493 = vmatprep.subr.mxu0 0.0
    %494 = vmatpush1.msra.mxu0 %v468
    %495 = vmatprep.subr.mxu0 0.0
    %496 = vmatpush1.msra.mxu0 %v469
    %497 = vmatprep.subr.mxu0 0.0
    %498 = vmatpush1.msra.mxu0 %v470
    %499 = vmatprep.subr.mxu0 0.0
    %500 = vmatpush1.msra.mxu0 %v471
    %501 = vmatprep.subr.mxu0 0.0
    %502 = vmatpush1.msra.mxu0 %v472
    %503 = vmatprep.subr.mxu0 0.0
    %504 = vmatpush1.msra.mxu0 %v473
    %505 = vmatprep.subr.mxu0 0.0
    %506 = vmatpush1.msra.mxu0 %v474
    %507 = vmatprep.subr.mxu0 0.0
    %508 = vmatpush1.msra.mxu0 0.0
    %509 = vmatprep.subr.mxu0 0.0
    %510 = vmatpush1.msra.mxu0 0.0
    %511 = vmatprep.subr.mxu0 0.0
    %512 = vmatpush1.msra.mxu0 0.0
    %513 = vmatprep.subr.mxu0 0.0
    %514 = vmatpush1.msra.mxu0 0.0
    %515 = vmatprep.subr.mxu0 0.0
    %516 = vmatpush1.msra.mxu0 0.0
    %517 = vmatprep.subr.mxu0 0.0
    %518 = vmatpush1.msra.mxu0 0.0
    %519 = vmatprep.subr.mxu0 0.0
    %520 = vmatpush1.msra.mxu0 0.0
    %521 = vmatprep.subr.mxu0 0.0
    %522 = vmatpush1.msra.mxu0 0.0
    %523 = vmatprep.subr.mxu0 0.0
    %524 = vmatpush1.msra.mxu0 0.0
    %525 = vmatprep.subr.mxu0 0.0
    %526 = vmatpush1.msra.mxu0 0.0
    %527 = vmatprep.subr.mxu0 0.0
    %528 = vmatpush1.msra.mxu0 0.0
    %529 = vmatprep.subr.mxu0 0.0
    %530 = vmatpush1.msra.mxu0 0.0
    %531 = vmatprep.subr.mxu0 0.0
    %532 = vmatpush1.msra.mxu0 0.0
    %533 = vmatprep.subr.mxu0 0.0
    %534 = vmatpush1.msra.mxu0 0.0
    %535 = vmatprep.subr.mxu0 0.0
    %536 = vmatpush1.msra.mxu0 0.0
    %537 = vmatprep.subr.mxu0 0.0
    %538 = vmatpush1.msra.mxu0 0.0
    %539 = vmatprep.mubr.f32.mxu0 0.0
    %540 = vmatmul.mubr.f32.gmra.mrb[0].mxu0 %v428
    %v541 = vpop.f32.mrb[0].mxu0
    %v542 = vadd.f32 0.0, %v541
    %v543 = vpop.f32.mrb[0].mxu0
    %544 = vmatprep.mubr.f32.mxu0 0.0
    %545 = vmatmul.mubr.f32.gmra.mrb[0].mxu0 %v430
    %v546 = vpop.f32.mrb[0].mxu0
    %v547 = vadd.f32 0.0, %v546
    %v548 = vpop.f32.mrb[0].mxu0
    %549 = vmatprep.mubr.f32.mxu0 0.0
    %550 = vmatmul.mubr.f32.gmra.mrb[0].mxu0 %v432
    %v551 = vpop.f32.mrb[0].mxu0
    %v552 = vadd.f32 0.0, %v551
    %v553 = vpop.f32.mrb[0].mxu0
    %554 = vmatprep.mubr.f32.mxu0 0.0
    %555 = vmatmul.mubr.f32.gmra.mrb[0].mxu0 %v434
    %v556 = vpop.f32.mrb[0].mxu0
    %v557 = vadd.f32 0.0, %v556
    %v558 = vpop.f32.mrb[0].mxu0
    %559 = vmatprep.mubr.f32.mxu0 0.0
    %560 = vmatmul.mubr.f32.gmra.mrb[0].mxu0 %v436
    %v561 = vpop.f32.mrb[0].mxu0
    %v562 = vadd.f32 0.0, %v561
    %v563 = vpop.f32.mrb[0].mxu0
    %564 = vmatprep.mubr.f32.mxu0 0.0
    %565 = vmatmul.mubr.f32.gmra.mrb[0].mxu0 %v438
    %v566 = vpop.f32.mrb[0].mxu0
    %v567 = vadd.f32 0.0, %v566
    %v568 = vpop.f32.mrb[0].mxu0
    %569 = vmatprep.mubr.f32.mxu0 0.0
    %570 = vmatmul.mubr.f32.gmra.mrb[0].mxu0 %v440
    %v571 = vpop.f32.mrb[0].mxu0
    %v572 = vadd.f32 0.0, %v571
    %v573 = vpop.f32.mrb[0].mxu0
    %574 = vmatprep.mubr.f32.mxu0 0.0
    %575 = vmatmul.mubr.f32.gmra.mrb[0].mxu0 %v442
    %v576 = vpop.f32.mrb[0].mxu0
    %v577 = vadd.f32 0.0, %v576
    %v578 = vpop.f32.mrb[0].mxu0
    %579 = vmatprep.mubr.f32.mxu0 0.0
    %580 = vmatmul.mubr.f32.gmra.mrb[0].mxu0 %v444
    %v581 = vpop.f32.mrb[0].mxu0
    %v582 = vadd.f32 0.0, %v581
    %v583 = vpop.f32.mrb[0].mxu0
    %584 = vmatprep.mubr.f32.mxu0 0.0
    %585 = vmatmul.mubr.f32.gmra.mrb[0].mxu0 %v446
    %v586 = vpop.f32.mrb[0].mxu0
    %v587 = vadd.f32 0.0, %v586
    %v588 = vpop.f32.mrb[0].mxu0
    %589 = vmatprep.mubr.f32.mxu0 0.0
    %590 = vmatmul.mubr.f32.gmra.mrb[0].mxu0 %v448
    %v591 = vpop.f32.mrb[0].mxu0
    %v592 = vadd.f32 0.0, %v591
    %v593 = vpop.f32.mrb[0].mxu0
    %594 = vmatprep.mubr.f32.mxu0 0.0
    %595 = vmatmul.mubr.f32.gmra.mrb[0].mxu0 %v450
    %v596 = vpop.f32.mrb[0].mxu0
    %v597 = vadd.f32 0.0, %v596
    %v598 = vpop.f32.mrb[0].mxu0
    %599 = vmatprep.mubr.f32.mxu0 0.0
    %600 = vmatmul.mubr.f32.gmra.mrb[0].mxu0 %v452
    %v601 = vpop.f32.mrb[0].mxu0
    %v602 = vadd.f32 0.0, %v601
    %v603 = vpop.f32.mrb[0].mxu0
    %604 = vmatprep.mubr.f32.mxu0 0.0
    %605 = vmatmul.mubr.f32.gmra.mrb[0].mxu0 %v454
    %v606 = vpop.f32.mrb[0].mxu0
    %v607 = vadd.f32 0.0, %v606
    %v608 = vpop.f32.mrb[0].mxu0
    %609 = vmatprep.mubr.f32.mxu0 0.0
    %610 = vmatmul.mubr.f32.gmra.mrb[0].mxu0 %v456
    %v611 = vpop.f32.mrb[0].mxu0
    %v612 = vadd.f32 0.0, %v611
    %v613 = vpop.f32.mrb[0].mxu0
    %614 = vmatprep.mubr.f32.mxu0 0.0
    %615 = vmatmul.mubr.f32.gmra.mrb[0].mxu0 %v458
    %v616 = vpop.f32.mrb[0].mxu0
    %v617 = vadd.f32 0.0, %v616
    %v618 = vpop.f32.mrb[0].mxu0
    %619 = vdwg.mxu0
    %v620 = vld [vmem:[#allocation7] sm:$0xff]
    %v621 = vld [vmem:[#allocation7 + $0x8] sm:$0xff]
    %v622 = vld [vmem:[#allocation7 + $0x10] sm:$0xff]
    %v623 = vld [vmem:[#allocation7 + $0x18] sm:$0xff]
    %v624 = vld [vmem:[#allocation7 + $0x20] sm:$0xff]
    %v625 = vld [vmem:[#allocation7 + $0x28] sm:$0xff]
    %v626 = vld [vmem:[#allocation7 + $0x30] sm:$0xff]
    %v627 = vld [vmem:[#allocation7 + $0x38] sm:$0xff]
    %v628 = vld [vmem:[#allocation7 + $0x40] sm:$0xff]
    %v629 = vld [vmem:[#allocation7 + $0x48] sm:$0xff]
    %v630 = vld [vmem:[#allocation7 + $0x50] sm:$0xff]
    %v631 = vld [vmem:[#allocation7 + $0x58] sm:$0xff]
    %v632 = vld [vmem:[#allocation7 + $0x60] sm:$0xff]
    %v633 = vld [vmem:[#allocation7 + $0x68] sm:$0xff]
    %v634 = vld [vmem:[#allocation7 + $0x70] sm:$0xff]
    %v635 = vld [vmem:[#allocation7 + $0x78] sm:$0xff]
    %v636 = vmul.f32 %v542, %v620
    %v637 = vmul.f32 %v547, %v621
    %v638 = vmul.f32 %v552, %v622
    %v639 = vmul.f32 %v557, %v623
    %v640 = vmul.f32 %v562, %v624
    %v641 = vmul.f32 %v567, %v625
    %v642 = vmul.f32 %v572, %v626
    %v643 = vmul.f32 %v577, %v627
    %v644 = vmul.f32 %v582, %v628
    %v645 = vmul.f32 %v587, %v629
    %v646 = vmul.f32 %v592, %v630
    %v647 = vmul.f32 %v597, %v631
    %v648 = vmul.f32 %v602, %v632
    %v649 = vmul.f32 %v607, %v633
    %v650 = vmul.f32 %v612, %v634
    %v651 = vmul.f32 %v617, %v635
    %v652 = vld [vmem:[#allocation8] sm:$0xff]
    %v653 = vld [vmem:[#allocation8 + $0x8] sm:$0xff]
    %v654 = vld [vmem:[#allocation8 + $0x10] sm:$0xff]
    %v655 = vld [vmem:[#allocation8 + $0x18] sm:$0xff]
    %v656 = vld [vmem:[#allocation8 + $0x20] sm:$0xff]
    %v657 = vld [vmem:[#allocation8 + $0x28] sm:$0xff]
    %v658 = vld [vmem:[#allocation8 + $0x30] sm:$0xff]
    %v659 = vld [vmem:[#allocation8 + $0x38] sm:$0xff]
    %v660 = vld [vmem:[#allocation8 + $0x40] sm:$0xff]
    %v661 = vld [vmem:[#allocation8 + $0x48] sm:$0xff]
    %v662 = vld [vmem:[#allocation8 + $0x50] sm:$0xff]
    %v663 = vld [vmem:[#allocation8 + $0x58] sm:$0xff]
    %v664 = vld [vmem:[#allocation8 + $0x60] sm:$0xff]
    %v665 = vld [vmem:[#allocation8 + $0x68] sm:$0xff]
    %v666 = vld [vmem:[#allocation8 + $0x70] sm:$0xff]
    %v667 = vld [vmem:[#allocation8 + $0x78] sm:$0xff]
    %v668 = vmul.f32 %v636, %v652
    %v669 = vmul.f32 %v637, %v653
    %v670 = vmul.f32 %v638, %v654
    %v671 = vmul.f32 %v639, %v655
    %v672 = vmul.f32 %v640, %v656
    %v673 = vmul.f32 %v641, %v657
    %v674 = vmul.f32 %v642, %v658
    %v675 = vmul.f32 %v643, %v659
    %v676 = vmul.f32 %v644, %v660
    %v677 = vmul.f32 %v645, %v661
    %v678 = vmul.f32 %v646, %v662
    %v679 = vmul.f32 %v647, %v663
    %v680 = vmul.f32 %v648, %v664
    %v681 = vmul.f32 %v649, %v665
    %v682 = vmul.f32 %v650, %v666
    %v683 = vmul.f32 %v651, %v667
    %v684 = vld [vmem:[#allocation13] sm:$0xff]
    %v685 = vld [vmem:[#allocation13 + $0x8] sm:$0xff]
    %v686 = vld [vmem:[#allocation13 + $0x10] sm:$0xff]
    %v687 = vld [vmem:[#allocation13 + $0x18] sm:$0xff]
    %v688 = vld [vmem:[#allocation13 + $0x20] sm:$0xff]
    %v689 = vld [vmem:[#allocation13 + $0x28] sm:$0xff]
    %v690 = vld [vmem:[#allocation13 + $0x30] sm:$0xff]
    %v691 = vld [vmem:[#allocation13 + $0x38] sm:$0xff]
    %v692 = vld [vmem:[#allocation13 + $0x40] sm:$0xff]
    %v693 = vld [vmem:[#allocation13 + $0x48] sm:$0xff]
    %v694 = vld [vmem:[#allocation13 + $0x50] sm:$0xff]
    %v695 = vld [vmem:[#allocation13 + $0x58] sm:$0xff]
    %v696 = vld [vmem:[#allocation13 + $0x60] sm:$0xff]
    %v697 = vld [vmem:[#allocation13 + $0x68] sm:$0xff]
    %v698 = vld [vmem:[#allocation13 + $0x70] sm:$0xff]
    %v699 = vld [vmem:[#allocation13 + $0x78] sm:$0xff]
    %700 = vmatprep.subr.mxu0 0.0
    %701 = vmatpush1.msra.mxu0 %v684
    %702 = vmatprep.subr.mxu0 0.0
    %703 = vmatpush1.msra.mxu0 %v685
    %704 = vmatprep.subr.mxu0 0.0
    %705 = vmatpush1.msra.mxu0 %v686
    %706 = vmatprep.subr.mxu0 0.0
    %707 = vmatpush1.msra.mxu0 %v687
    %708 = vmatprep.subr.mxu0 0.0
    %709 = vmatpush1.msra.mxu0 %v688
    %710 = vmatprep.subr.mxu0 0.0
    %711 = vmatpush1.msra.mxu0 %v689
    %712 = vmatprep.subr.mxu0 0.0
    %713 = vmatpush1.msra.mxu0 %v690
    %714 = vmatprep.subr.mxu0 0.0
    %715 = vmatpush1.msra.mxu0 %v691
    %716 = vmatprep.subr.mxu0 0.0
    %717 = vmatpush1.msra.mxu0 %v692
    %718 = vmatprep.subr.mxu0 0.0
    %719 = vmatpush1.msra.mxu0 %v693
    %720 = vmatprep.subr.mxu0 0.0
    %721 = vmatpush1.msra.mxu0 %v694
    %722 = vmatprep.subr.mxu0 0.0
    %723 = vmatpush1.msra.mxu0 %v695
    %724 = vmatprep.subr.mxu0 0.0
    %725 = vmatpush1.msra.mxu0 %v696
    %726 = vmatprep.subr.mxu0 0.0
    %727 = vmatpush1.msra.mxu0 %v697
    %728 = vmatprep.subr.mxu0 0.0
    %729 = vmatpush1.msra.mxu0 %v698
    %730 = vmatprep.subr.mxu0 0.0
    %731 = vmatpush1.msra.mxu0 %v699
    %732 = vmatprep.subr.mxu0 0.0
    %733 = vmatpush1.msra.mxu0 0.0
    %734 = vmatprep.subr.mxu0 0.0
    %735 = vmatpush1.msra.mxu0 0.0
    %736 = vmatprep.subr.mxu0 0.0
    %737 = vmatpush1.msra.mxu0 0.0
    %738 = vmatprep.subr.mxu0 0.0
    %739 = vmatpush1.msra.mxu0 0.0
    %740 = vmatprep.subr.mxu0 0.0
    %741 = vmatpush1.msra.mxu0 0.0
    %742 = vmatprep.subr.mxu0 0.0
    %743 = vmatpush1.msra.mxu0 0.0
    %744 = vmatprep.subr.mxu0 0.0
    %745 = vmatpush1.msra.mxu0 0.0
    %746 = vmatprep.subr.mxu0 0.0
    %747 = vmatpush1.msra.mxu0 0.0
    %748 = vmatprep.subr.mxu0 0.0
    %749 = vmatpush1.msra.mxu0 0.0
    %750 = vmatprep.subr.mxu0 0.0
    %751 = vmatpush1.msra.mxu0 0.0
    %752 = vmatprep.subr.mxu0 0.0
    %753 = vmatpush1.msra.mxu0 0.0
    %754 = vmatprep.subr.mxu0 0.0
    %755 = vmatpush1.msra.mxu0 0.0
    %756 = vmatprep.subr.mxu0 0.0
    %757 = vmatpush1.msra.mxu0 0.0
    %758 = vmatprep.subr.mxu0 0.0
    %759 = vmatpush1.msra.mxu0 0.0
    %760 = vmatprep.subr.mxu0 0.0
    %761 = vmatpush1.msra.mxu0 0.0
    %762 = vmatprep.subr.mxu0 0.0
    %763 = vmatpush1.msra.mxu0 0.0
    %764 = vmatprep.mubr.f32.mxu0 0.0
    %765 = vmatmul.mubr.f32.gmra.mrb[0].mxu0 %v668
    %v766 = vpop.f32.mrb[0].mxu0
    %v767 = vadd.f32 0.0, %v766
    %v768 = vpop.f32.mrb[0].mxu0
    %769 = vmatprep.mubr.f32.mxu0 0.0
    %770 = vmatmul.mubr.f32.gmra.mrb[0].mxu0 %v669
    %v771 = vpop.f32.mrb[0].mxu0
    %v772 = vadd.f32 0.0, %v771
    %v773 = vpop.f32.mrb[0].mxu0
    %774 = vmatprep.mubr.f32.mxu0 0.0
    %775 = vmatmul.mubr.f32.gmra.mrb[0].mxu0 %v670
    %v776 = vpop.f32.mrb[0].mxu0
    %v777 = vadd.f32 0.0, %v776
    %v778 = vpop.f32.mrb[0].mxu0
    %779 = vmatprep.mubr.f32.mxu0 0.0
    %780 = vmatmul.mubr.f32.gmra.mrb[0].mxu0 %v671
    %v781 = vpop.f32.mrb[0].mxu0
    %v782 = vadd.f32 0.0, %v781
    %v783 = vpop.f32.mrb[0].mxu0
    %784 = vmatprep.mubr.f32.mxu0 0.0
    %785 = vmatmul.mubr.f32.gmra.mrb[0].mxu0 %v672
    %v786 = vpop.f32.mrb[0].mxu0
    %v787 = vadd.f32 0.0, %v786
    %v788 = vpop.f32.mrb[0].mxu0
    %789 = vmatprep.mubr.f32.mxu0 0.0
    %790 = vmatmul.mubr.f32.gmra.mrb[0].mxu0 %v673
    %v791 = vpop.f32.mrb[0].mxu0
    %v792 = vadd.f32 0.0, %v791
    %v793 = vpop.f32.mrb[0].mxu0
    %794 = vmatprep.mubr.f32.mxu0 0.0
    %795 = vmatmul.mubr.f32.gmra.mrb[0].mxu0 %v674
    %v796 = vpop.f32.mrb[0].mxu0
    %v797 = vadd.f32 0.0, %v796
    %v798 = vpop.f32.mrb[0].mxu0
    %799 = vmatprep.mubr.f32.mxu0 0.0
    %800 = vmatmul.mubr.f32.gmra.mrb[0].mxu0 %v675
    %v801 = vpop.f32.mrb[0].mxu0
    %v802 = vadd.f32 0.0, %v801
    %v803 = vpop.f32.mrb[0].mxu0
    %804 = vmatprep.mubr.f32.mxu0 0.0
    %805 = vmatmul.mubr.f32.gmra.mrb[0].mxu0 %v676
    %v806 = vpop.f32.mrb[0].mxu0
    %v807 = vadd.f32 0.0, %v806
    %v808 = vpop.f32.mrb[0].mxu0
    %809 = vmatprep.mubr.f32.mxu0 0.0
    %810 = vmatmul.mubr.f32.gmra.mrb[0].mxu0 %v677
    %v811 = vpop.f32.mrb[0].mxu0
    %v812 = vadd.f32 0.0, %v811
    %v813 = vpop.f32.mrb[0].mxu0
    %814 = vmatprep.mubr.f32.mxu0 0.0
    %815 = vmatmul.mubr.f32.gmra.mrb[0].mxu0 %v678
    %v816 = vpop.f32.mrb[0].mxu0
    %v817 = vadd.f32 0.0, %v816
    %v818 = vpop.f32.mrb[0].mxu0
    %819 = vmatprep.mubr.f32.mxu0 0.0
    %820 = vmatmul.mubr.f32.gmra.mrb[0].mxu0 %v679
    %v821 = vpop.f32.mrb[0].mxu0
    %v822 = vadd.f32 0.0, %v821
    %v823 = vpop.f32.mrb[0].mxu0
    %824 = vmatprep.mubr.f32.mxu0 0.0
    %825 = vmatmul.mubr.f32.gmra.mrb[0].mxu0 %v680
    %v826 = vpop.f32.mrb[0].mxu0
    %v827 = vadd.f32 0.0, %v826
    %v828 = vpop.f32.mrb[0].mxu0
    %829 = vmatprep.mubr.f32.mxu0 0.0
    %830 = vmatmul.mubr.f32.gmra.mrb[0].mxu0 %v681
    %v831 = vpop.f32.mrb[0].mxu0
    %v832 = vadd.f32 0.0, %v831
    %v833 = vpop.f32.mrb[0].mxu0
    %834 = vmatprep.mubr.f32.mxu0 0.0
    %835 = vmatmul.mubr.f32.gmra.mrb[0].mxu0 %v682
    %v836 = vpop.f32.mrb[0].mxu0
    %v837 = vadd.f32 0.0, %v836
    %v838 = vpop.f32.mrb[0].mxu0
    %839 = vmatprep.mubr.f32.mxu0 0.0
    %840 = vmatmul.mubr.f32.gmra.mrb[0].mxu0 %v683
    %v841 = vpop.f32.mrb[0].mxu0
    %v842 = vadd.f32 0.0, %v841
    %v843 = vpop.f32.mrb[0].mxu0
    %844 = vdwg.mxu0
    %845 = vst [vmem:[#allocation14] sm:$0xff] %v767
    %846 = vst [vmem:[#allocation14 + $0x8] sm:$0xff] %v772
    %847 = vst [vmem:[#allocation14 + $0x10] sm:$0xff] %v777
    %848 = vst [vmem:[#allocation14 + $0x18] sm:$0xff] %v782
    %849 = vst [vmem:[#allocation14 + $0x20] sm:$0xff] %v787
    %850 = vst [vmem:[#allocation14 + $0x28] sm:$0xff] %v792
    %851 = vst [vmem:[#allocation14 + $0x30] sm:$0xff] %v797
    %852 = vst [vmem:[#allocation14 + $0x38] sm:$0xff] %v802
    %853 = vst [vmem:[#allocation14 + $0x40] sm:$0xff] %v807
    %854 = vst [vmem:[#allocation14 + $0x48] sm:$0xff] %v812
    %855 = vst [vmem:[#allocation14 + $0x50] sm:$0xff] %v817
    %856 = vst [vmem:[#allocation14 + $0x58] sm:$0xff] %v822
    %857 = vst [vmem:[#allocation14 + $0x60] sm:$0xff] %v827
    %858 = vst [vmem:[#allocation14 + $0x68] sm:$0xff] %v832
    %859 = vst [vmem:[#allocation14 + $0x70] sm:$0xff] %v837
    %860 = vst [vmem:[#allocation14 + $0x78] sm:$0xff] %v842
    // Predicated region
    $region58: #{tpu_custom_call.1} parent=1 // pred_check
      _
    $region59: #{tpu_custom_call.1} parent=1 // pred_check_branch
      %862 = sbr.rel (0) target = $region61
    $region60: #{tpu_custom_call.1} parent=1 // pred_region
      %s864 = ssub.s32 2048, 2048
      %865 = vsyncadd [#allocation4], %s864
      %s866 = sshll.u32 [#allocation14], 4
      %s867 = int_to_ptr.vmem [resolvable:$true] %s866
      %872 = dma.vmem_to_hbm [thread:$0]  %s867, 2048, %s7, [#allocation4], 128, 128, 8
    $region61: #{tpu_custom_call.1} parent=1 // pred_fallthru
      _
    // Predicated region
    $region62: #{tpu_custom_call.1} parent=1 // pred_check
      _
    $region63: #{tpu_custom_call.1} parent=1 // pred_check_branch
      %874 = sbr.rel (0) target = $region65
    $region64: #{tpu_custom_call.1} parent=1 // pred_region
      %875 = dma.done [#allocation4], 2048
    $region65: #{tpu_custom_call.1} parent=1 // pred_fallthru
      _
    %876 = vsyncpa [#allocation3], 1
    %877 = vsyncpa [#allocation6], 1
    %878 = vsyncpa [#allocation9], 1
    %879 = vsyncpa [#allocation12], 1
    %880 = vsyncpa [#allocation4], 1

</llo_original>
